<compile_context>
chip_gen: v7x
topology: tpu7x:2x2x1
jax: 0.10.0
libtpu: 0.0.40
codegen_flags: <defaults>
</compile_context>

<pallas_src>
import math
import functools

import jax
import jax.numpy as jnp
from jax.experimental import pallas as pl
from jax.experimental.pallas import tpu as pltpu

# ---- static hyperparameters (small, synthetic) ----
HYPER = dict(
    postcomb_dim=32,            # -> Dh = postcomb_dim // 2 = 16
    postcomb_layers=2,
    projection_space_dims=16,
    ball_radius=1.0,
)
ESM_DIM = 480                   # fixed ESM per-protein embedding dim in the module
ESM_PAD = 512                   # 480 -> 512: lane-aligned K tiles for the big matmul
L_RES = 8                       # synthetic residues per protein
DH = HYPER['postcomb_dim'] // 2
P = HYPER['postcomb_dim']
PROJ = HYPER['projection_space_dims']
N_LAYERS = HYPER['postcomb_layers']

VMEM_SPEC = pl.BlockSpec(memory_space=pltpu.MemorySpace.VMEM)


def _round_up(x, m):
    return (x + m - 1) // m * m


# ---------- fused kernel: ProteinEmbedder dense tail + ball classifier ----------
def _fused_kernel(e1d_ref, gat_ref,
                  wpre_ref, bpre_ref, wpm_ref, bpm_ref,
                  wc0a_ref, wc0b_ref, bc0_ref,
                  wc_ref, bc_ref, gam_ref, bet_ref,
                  wproj_ref, bproj_ref,
                  proto_ref, pin_ref,
                  *, n_layers, n_pos, coeff):
    # preReadout (Linear) per residue then mean over residues.
    # By linearity: mean_residues(g) @ W_pre + b_pre.
    g_mean = jnp.mean(gat_ref[...], axis=1)                               # (N, DH)
    gat_read = jnp.dot(g_mean, wpre_ref[...],
                       preferred_element_type=jnp.float32) + bpre_ref[...]
    mean_out = jnp.dot(e1d_ref[...], wpm_ref[...],
                       preferred_element_type=jnp.float32) + bpm_ref[...]

    # concat([mean_out, gat_read], axis=1) @ W0  ==
    #     mean_out @ W0[:DH] + gat_read @ W0[DH:]   (no lane-axis concat)
    h = (jnp.dot(mean_out, wc0a_ref[...], preferred_element_type=jnp.float32)
         + jnp.dot(gat_read, wc0b_ref[...], preferred_element_type=jnp.float32)
         + bc0_ref[...])

    for l in range(n_layers):                                             # static unroll
        if l > 0:
            h = (jnp.dot(h, wc_ref[l - 1], preferred_element_type=jnp.float32)
                 + bc_ref[l - 1])
        h = jnp.where(h > 0, h, 0.01 * h)                                 # LeakyReLU(0.01)
        # one-pass LayerNorm (biased variance, PyTorch semantics) with rsqrt
        mu = jnp.mean(h, axis=-1, keepdims=True)
        msq = jnp.mean(h * h, axis=-1, keepdims=True)
        var = msq - mu * mu
        h = (h - mu) * jax.lax.rsqrt(var + 1e-5) * gam_ref[l] + bet_ref[l]

    emb = jnp.dot(h, wproj_ref[...],
                  preferred_element_type=jnp.float32) + bproj_ref[...]    # (N, PROJ)

    # ---- ball classifier (fused) ----
    row_ids = jax.lax.broadcasted_iota(jnp.int32, emb.shape, 0)
    pos_mask = (row_ids < n_pos).astype(jnp.float32)                      # padded rows excluded
    proto = jnp.sum(emb * pos_mask, axis=0, keepdims=True) * (1.0 / n_pos)
    proto_ref[...] = proto                                                # (1, PROJ)
    diff = emb - proto
    d = jnp.sqrt(jnp.sum(diff * diff, axis=1, keepdims=True))             # (N, 1)
    pin_ref[...] = jnp.exp(-d * coeff)                                    # probInside per row


# -------------------- forward wrapper (single pallas_call, jitted) --------------------
def _forward_impl(params, pos_e1d, pos_gat, q_e1d, q_gat):
    n_pos = pos_e1d.shape[0]
    n_query = q_e1d.shape[0]
    n_total = n_pos + n_query
    n_pad = _round_up(n_total, 8)                      # full sublanes per vreg

    # Stack positives + queries into ONE batch; pad rows to a multiple of 8 and
    # the ESM feature axis 480 -> 512 (zero pad, exact: padded K rows are zero).
    e1d = jnp.concatenate([pos_e1d, q_e1d], axis=0)
    e1d = jnp.pad(e1d, ((0, n_pad - n_total), (0, ESM_PAD - ESM_DIM)))
    gat = jnp.concatenate([pos_gat, q_gat], axis=0)
    gat = jnp.pad(gat, ((0, n_pad - n_total), (0, 0), (0, 0)))
    w_pm = jnp.pad(params['w_pm'], ((0, ESM_PAD - ESM_DIM), (0, 0)))

    coeff = math.log(2.0) / HYPER['ball_radius']
    kernel = functools.partial(_fused_kernel, n_layers=N_LAYERS,
                               n_pos=n_pos, coeff=coeff)

    # Small protein counts: everything resident in VMEM, one launch.
    # TODO(synk): for very large protein counts switch to a row-tiled grid
    #             ("parallel" axis on v7x) with resident weights.
    proto, p_in = pl.pallas_call(
        kernel,
        out_shape=(jax.ShapeDtypeStruct((1, PROJ), jnp.float32),
                   jax.ShapeDtypeStruct((n_pad, 1), jnp.float32)),
        in_specs=[VMEM_SPEC] * 15,
        out_specs=(VMEM_SPEC, VMEM_SPEC),
    )(e1d, gat,
      params['w_pre'], params['b_pre'], w_pm, params['b_pm'],
      params['w_comb'][0, :DH], params['w_comb'][0, DH:], params['b_comb'][0],
      params['w_comb'][1:], params['b_comb'][1:],
      params['ln_g'], params['ln_b'],
      params['w_proj'], params['b_proj'])

    p_in_q = p_in[n_pos:n_total, 0]                                        # (Nq,)
    probs = jnp.stack([p_in_q, 1.0 - p_in_q], axis=1)                      # (Nq, 2)
    return proto[0], probs


ball_classifier_forward = jax.jit(_forward_impl)


# -------------------- pure-JAX reference (same math, no Pallas) --------------------
def _ref_embedder(params, e1d, gat_out):
    g_mean = jnp.mean(gat_out, axis=1)
    gat_read = g_mean @ params['w_pre'] + params['b_pre']
    mean_out = e1d @ params['w_pm'] + params['b_pm']
    h = jnp.concatenate([mean_out, gat_read], axis=1)
    for l in range(N_LAYERS):
        h = h @ params['w_comb'][l] + params['b_comb'][l]
        h = jnp.where(h > 0, h, 0.01 * h)
        mu = jnp.mean(h, axis=-1, keepdims=True)
        var = jnp.mean((h - mu) ** 2, axis=-1, keepdims=True)
        h = (h - mu) / jnp.sqrt(var + 1e-5) * params['ln_g'][l] + params['ln_b'][l]
    return h @ params['w_proj'] + params['b_proj']


def _ref_forward(params, pos_e1d, pos_gat, q_e1d, q_gat):
    pos_emb = _ref_embedder(params, pos_e1d, pos_gat)
    q_emb = _ref_embedder(params, q_e1d, q_gat)
    proto = jnp.mean(pos_emb, axis=0)
    d = jnp.sqrt(jnp.sum((q_emb - proto[None, :]) ** 2, axis=1))
    coeff = math.log(2.0) / HYPER['ball_radius']
    p_in = jnp.exp(-d * coeff)
    return proto, jnp.stack([p_in, 1.0 - p_in], axis=1)


# -------------------- deterministic parameter / input construction --------------------
def _uniform(key, shape, fan_in):
    bound = 1.0 / math.sqrt(fan_in)
    return jax.random.uniform(key, shape, jnp.float32, -bound, bound)


def make_params(key):
    ks = jax.random.split(key, 10)
    return dict(
        w_pre=_uniform(ks[0], (DH, DH), DH),
        b_pre=_uniform(ks[1], (1, DH), DH),
        w_pm=_uniform(ks[2], (ESM_DIM, DH), ESM_DIM),
        b_pm=_uniform(ks[3], (1, DH), ESM_DIM),
        w_comb=_uniform(ks[4], (N_LAYERS, P, P), P),
        b_comb=_uniform(ks[5], (N_LAYERS, 1, P), P),
        ln_g=jnp.ones((N_LAYERS, 1, P), jnp.float32),   # PyTorch LayerNorm default
        ln_b=jnp.zeros((N_LAYERS, 1, P), jnp.float32),
        w_proj=_uniform(ks[6], (P, PROJ), P),
        b_proj=_uniform(ks[7], (1, PROJ), P),
    )


if __name__ == "__main__":
    key = jax.random.PRNGKey(0)
    kp, k1, k2, k3, k4 = jax.random.split(key, 5)
    params = make_params(kp)

    n_pos, n_query = 4, 3   # number of positive / query "protein IDs"
    pos_e1d = jax.random.normal(k1, (n_pos, ESM_DIM), jnp.float32)
    pos_gat = jax.random.normal(k2, (n_pos, L_RES, DH), jnp.float32)
    q_e1d = jax.random.normal(k3, (n_query, ESM_DIM), jnp.float32)
    q_gat = jax.random.normal(k4, (n_query, L_RES, DH), jnp.float32)

    proto, probs = ball_classifier_forward(params, pos_e1d, pos_gat, q_e1d, q_gat)
    probs = jax.block_until_ready(probs)
    proto = jax.block_until_ready(proto)

    proto_ref, probs_ref = _ref_forward(params, pos_e1d, pos_gat, q_e1d, q_gat)
    assert probs.shape == (n_query, 2)
    assert proto.shape == (PROJ,)
    assert jnp.allclose(proto, proto_ref, rtol=1e-4, atol=1e-4)
    assert jnp.allclose(probs, probs_ref, rtol=1e-4, atol=1e-4)

    print("KERNEL_OK")
</pallas_src>

<mosaic_0001>
module attributes {stable_mosaic.version = 11 : i64} {
  func.func @_fused_kernel(%arg0: memref<8x512xf32, #tpu.memory_space<vmem>>, %arg1: memref<8x8x16xf32, #tpu.memory_space<vmem>>, %arg2: memref<16x16xf32, #tpu.memory_space<vmem>>, %arg3: memref<1x16xf32, #tpu.memory_space<vmem>>, %arg4: memref<512x16xf32, #tpu.memory_space<vmem>>, %arg5: memref<1x16xf32, #tpu.memory_space<vmem>>, %arg6: memref<16x32xf32, #tpu.memory_space<vmem>>, %arg7: memref<16x32xf32, #tpu.memory_space<vmem>>, %arg8: memref<1x32xf32, #tpu.memory_space<vmem>>, %arg9: memref<1x32x32xf32, #tpu.memory_space<vmem>>, %arg10: memref<1x1x32xf32, #tpu.memory_space<vmem>>, %arg11: memref<2x1x32xf32, #tpu.memory_space<vmem>>, %arg12: memref<2x1x32xf32, #tpu.memory_space<vmem>>, %arg13: memref<32x16xf32, #tpu.memory_space<vmem>>, %arg14: memref<1x16xf32, #tpu.memory_space<vmem>>, %arg15: memref<1x16xf32, #tpu.memory_space<vmem>>, %arg16: memref<8x1xf32, #tpu.memory_space<vmem>>) attributes {dimension_semantics = [], scalar_prefetch = 0 : i64, scratch_operands = 0 : i64, tpu.core_type = #tpu.core_type<tc>} {
    %c0 = arith.constant 0 : index
    %c0_0 = arith.constant 0 : index
    %c0_1 = arith.constant 0 : index
    %0 = vector.load %arg1[%c0, %c0_0, %c0_1] : memref<8x8x16xf32, #tpu.memory_space<vmem>>, vector<8x8x16xf32>
    %cst = arith.constant dense<0.000000e+00> : vector<8x16xf32>
    %1 = vector.multi_reduction <add>, %0, %cst [1] : vector<8x8x16xf32> to vector<8x16xf32>
    %cst_2 = arith.constant 8.000000e+00 : f32
    %2 = vector.broadcast %cst_2 : f32 to vector<8x16xf32>
    %3 = arith.divf %1, %2 : vector<8x16xf32>
    %c0_3 = arith.constant 0 : index
    %c0_4 = arith.constant 0 : index
    %4 = vector.load %arg2[%c0_3, %c0_4] : memref<16x16xf32, #tpu.memory_space<vmem>>, vector<16x16xf32>
    %cst_5 = arith.constant dense<0.000000e+00> : vector<8x16xf32>
    %5 = tpu.matmul %3, %4, %cst_5 {dimension_numbers = #tpu.dot_dimension_numbers<[1], [0], [0], [1], [0, 0, 1, 1], [], []>} : vector<8x16xf32>, vector<16x16xf32>, vector<8x16xf32> -> vector<8x16xf32>
    %c0_6 = arith.constant 0 : index
    %c0_7 = arith.constant 0 : index
    %6 = vector.load %arg3[%c0_6, %c0_7] : memref<1x16xf32, #tpu.memory_space<vmem>>, vector<1x16xf32>
    %7 = vector.broadcast %6 : vector<1x16xf32> to vector<8x16xf32>
    %8 = arith.addf %5, %7 : vector<8x16xf32>
    %c0_8 = arith.constant 0 : index
    %c0_9 = arith.constant 0 : index
    %9 = vector.load %arg0[%c0_8, %c0_9] : memref<8x512xf32, #tpu.memory_space<vmem>>, vector<8x512xf32>
    %c0_10 = arith.constant 0 : index
    %c0_11 = arith.constant 0 : index
    %10 = vector.load %arg4[%c0_10, %c0_11] : memref<512x16xf32, #tpu.memory_space<vmem>>, vector<512x16xf32>
    %cst_12 = arith.constant dense<0.000000e+00> : vector<8x16xf32>
    %11 = tpu.matmul %9, %10, %cst_12 {dimension_numbers = #tpu.dot_dimension_numbers<[1], [0], [0], [1], [0, 0, 1, 1], [], []>} : vector<8x512xf32>, vector<512x16xf32>, vector<8x16xf32> -> vector<8x16xf32>
    %c0_13 = arith.constant 0 : index
    %c0_14 = arith.constant 0 : index
    %12 = vector.load %arg5[%c0_13, %c0_14] : memref<1x16xf32, #tpu.memory_space<vmem>>, vector<1x16xf32>
    %13 = vector.broadcast %12 : vector<1x16xf32> to vector<8x16xf32>
    %14 = arith.addf %11, %13 : vector<8x16xf32>
    %c0_15 = arith.constant 0 : index
    %c0_16 = arith.constant 0 : index
    %15 = vector.load %arg6[%c0_15, %c0_16] : memref<16x32xf32, #tpu.memory_space<vmem>>, vector<16x32xf32>
    %cst_17 = arith.constant dense<0.000000e+00> : vector<8x32xf32>
    %16 = tpu.matmul %14, %15, %cst_17 {dimension_numbers = #tpu.dot_dimension_numbers<[1], [0], [0], [1], [0, 0, 1, 1], [], []>} : vector<8x16xf32>, vector<16x32xf32>, vector<8x32xf32> -> vector<8x32xf32>
    %c0_18 = arith.constant 0 : index
    %c0_19 = arith.constant 0 : index
    %17 = vector.load %arg7[%c0_18, %c0_19] : memref<16x32xf32, #tpu.memory_space<vmem>>, vector<16x32xf32>
    %cst_20 = arith.constant dense<0.000000e+00> : vector<8x32xf32>
    %18 = tpu.matmul %8, %17, %cst_20 {dimension_numbers = #tpu.dot_dimension_numbers<[1], [0], [0], [1], [0, 0, 1, 1], [], []>} : vector<8x16xf32>, vector<16x32xf32>, vector<8x32xf32> -> vector<8x32xf32>
    %19 = arith.addf %16, %18 : vector<8x32xf32>
    %c0_21 = arith.constant 0 : index
    %c0_22 = arith.constant 0 : index
    %20 = vector.load %arg8[%c0_21, %c0_22] : memref<1x32xf32, #tpu.memory_space<vmem>>, vector<1x32xf32>
    %21 = vector.broadcast %20 : vector<1x32xf32> to vector<8x32xf32>
    %22 = arith.addf %19, %21 : vector<8x32xf32>
    %cst_23 = arith.constant 0.000000e+00 : f32
    %23 = vector.broadcast %cst_23 : f32 to vector<8x32xf32>
    %24 = arith.cmpf ogt, %22, %23 : vector<8x32xf32>
    %cst_24 = arith.constant 0.00999999977 : f32
    %25 = vector.broadcast %cst_24 : f32 to vector<8x32xf32>
    %26 = arith.mulf %25, %22 : vector<8x32xf32>
    %27 = arith.select %24, %22, %26 : vector<8x32xi1>, vector<8x32xf32>
    %cst_25 = arith.constant dense<0.000000e+00> : vector<8xf32>
    %28 = vector.multi_reduction <add>, %27, %cst_25 [1] : vector<8x32xf32> to vector<8xf32>
    %29 = vector.shape_cast %28 : vector<8xf32> to vector<8x1xf32>
    %cst_26 = arith.constant 3.200000e+01 : f32
    %30 = vector.broadcast %cst_26 : f32 to vector<8x1xf32>
    %31 = arith.divf %29, %30 : vector<8x1xf32>
    %32 = arith.mulf %27, %27 : vector<8x32xf32>
    %cst_27 = arith.constant dense<0.000000e+00> : vector<8xf32>
    %33 = vector.multi_reduction <add>, %32, %cst_27 [1] : vector<8x32xf32> to vector<8xf32>
    %34 = vector.shape_cast %33 : vector<8xf32> to vector<8x1xf32>
    %cst_28 = arith.constant 3.200000e+01 : f32
    %35 = vector.broadcast %cst_28 : f32 to vector<8x1xf32>
    %36 = arith.divf %34, %35 : vector<8x1xf32>
    %37 = arith.mulf %31, %31 : vector<8x1xf32>
    %38 = arith.subf %36, %37 : vector<8x1xf32>
    %39 = vector.broadcast %31 : vector<8x1xf32> to vector<8x32xf32>
    %40 = arith.subf %27, %39 : vector<8x32xf32>
    %cst_29 = arith.constant 9.99999974E-6 : f32
    %41 = vector.broadcast %cst_29 : f32 to vector<8x1xf32>
    %42 = arith.addf %38, %41 : vector<8x1xf32>
    %43 = math.rsqrt %42 : vector<8x1xf32>
    %44 = vector.broadcast %43 : vector<8x1xf32> to vector<8x32xf32>
    %45 = arith.mulf %40, %44 : vector<8x32xf32>
    %c0_30 = arith.constant 0 : index
    %c0_31 = arith.constant 0 : index
    %c0_32 = arith.constant 0 : index
    %46 = vector.load %arg11[%c0_30, %c0_31, %c0_32] : memref<2x1x32xf32, #tpu.memory_space<vmem>>, vector<1x1x32xf32>
    %47 = vector.shape_cast %46 : vector<1x1x32xf32> to vector<1x32xf32>
    %48 = vector.broadcast %47 : vector<1x32xf32> to vector<8x32xf32>
    %49 = arith.mulf %45, %48 : vector<8x32xf32>
    %c0_33 = arith.constant 0 : index
    %c0_34 = arith.constant 0 : index
    %c0_35 = arith.constant 0 : index
    %50 = vector.load %arg12[%c0_33, %c0_34, %c0_35] : memref<2x1x32xf32, #tpu.memory_space<vmem>>, vector<1x1x32xf32>
    %51 = vector.shape_cast %50 : vector<1x1x32xf32> to vector<1x32xf32>
    %52 = vector.broadcast %51 : vector<1x32xf32> to vector<8x32xf32>
    %53 = arith.addf %49, %52 : vector<8x32xf32>
    %c0_36 = arith.constant 0 : index
    %c0_37 = arith.constant 0 : index
    %c0_38 = arith.constant 0 : index
    %54 = vector.load %arg9[%c0_36, %c0_37, %c0_38] : memref<1x32x32xf32, #tpu.memory_space<vmem>>, vector<1x32x32xf32>
    %55 = vector.shape_cast %54 : vector<1x32x32xf32> to vector<32x32xf32>
    %cst_39 = arith.constant dense<0.000000e+00> : vector<8x32xf32>
    %56 = tpu.matmul %53, %55, %cst_39 {dimension_numbers = #tpu.dot_dimension_numbers<[1], [0], [0], [1], [0, 0, 1, 1], [], []>} : vector<8x32xf32>, vector<32x32xf32>, vector<8x32xf32> -> vector<8x32xf32>
    %c0_40 = arith.constant 0 : index
    %c0_41 = arith.constant 0 : index
    %c0_42 = arith.constant 0 : index
    %57 = vector.load %arg10[%c0_40, %c0_41, %c0_42] : memref<1x1x32xf32, #tpu.memory_space<vmem>>, vector<1x1x32xf32>
    %58 = vector.shape_cast %57 : vector<1x1x32xf32> to vector<1x32xf32>
    %59 = vector.broadcast %58 : vector<1x32xf32> to vector<8x32xf32>
    %60 = arith.addf %56, %59 : vector<8x32xf32>
    %cst_43 = arith.constant 0.000000e+00 : f32
    %61 = vector.broadcast %cst_43 : f32 to vector<8x32xf32>
    %62 = arith.cmpf ogt, %60, %61 : vector<8x32xf32>
    %cst_44 = arith.constant 0.00999999977 : f32
    %63 = vector.broadcast %cst_44 : f32 to vector<8x32xf32>
    %64 = arith.mulf %63, %60 : vector<8x32xf32>
    %65 = arith.select %62, %60, %64 : vector<8x32xi1>, vector<8x32xf32>
    %cst_45 = arith.constant dense<0.000000e+00> : vector<8xf32>
    %66 = vector.multi_reduction <add>, %65, %cst_45 [1] : vector<8x32xf32> to vector<8xf32>
    %67 = vector.shape_cast %66 : vector<8xf32> to vector<8x1xf32>
    %cst_46 = arith.constant 3.200000e+01 : f32
    %68 = vector.broadcast %cst_46 : f32 to vector<8x1xf32>
    %69 = arith.divf %67, %68 : vector<8x1xf32>
    %70 = arith.mulf %65, %65 : vector<8x32xf32>
    %cst_47 = arith.constant dense<0.000000e+00> : vector<8xf32>
    %71 = vector.multi_reduction <add>, %70, %cst_47 [1] : vector<8x32xf32> to vector<8xf32>
    %72 = vector.shape_cast %71 : vector<8xf32> to vector<8x1xf32>
    %cst_48 = arith.constant 3.200000e+01 : f32
    %73 = vector.broadcast %cst_48 : f32 to vector<8x1xf32>
    %74 = arith.divf %72, %73 : vector<8x1xf32>
    %75 = arith.mulf %69, %69 : vector<8x1xf32>
    %76 = arith.subf %74, %75 : vector<8x1xf32>
    %77 = vector.broadcast %69 : vector<8x1xf32> to vector<8x32xf32>
    %78 = arith.subf %65, %77 : vector<8x32xf32>
    %cst_49 = arith.constant 9.99999974E-6 : f32
    %79 = vector.broadcast %cst_49 : f32 to vector<8x1xf32>
    %80 = arith.addf %76, %79 : vector<8x1xf32>
    %81 = math.rsqrt %80 : vector<8x1xf32>
    %82 = vector.broadcast %81 : vector<8x1xf32> to vector<8x32xf32>
    %83 = arith.mulf %78, %82 : vector<8x32xf32>
    %c1 = arith.constant 1 : index
    %c0_50 = arith.constant 0 : index
    %c0_51 = arith.constant 0 : index
    %84 = vector.load %arg11[%c1, %c0_50, %c0_51] : memref<2x1x32xf32, #tpu.memory_space<vmem>>, vector<1x1x32xf32>
    %85 = vector.shape_cast %84 : vector<1x1x32xf32> to vector<1x32xf32>
    %86 = vector.broadcast %85 : vector<1x32xf32> to vector<8x32xf32>
    %87 = arith.mulf %83, %86 : vector<8x32xf32>
    %c1_52 = arith.constant 1 : index
    %c0_53 = arith.constant 0 : index
    %c0_54 = arith.constant 0 : index
    %88 = vector.load %arg12[%c1_52, %c0_53, %c0_54] : memref<2x1x32xf32, #tpu.memory_space<vmem>>, vector<1x1x32xf32>
    %89 = vector.shape_cast %88 : vector<1x1x32xf32> to vector<1x32xf32>
    %90 = vector.broadcast %89 : vector<1x32xf32> to vector<8x32xf32>
    %91 = arith.addf %87, %90 : vector<8x32xf32>
    %c0_55 = arith.constant 0 : index
    %c0_56 = arith.constant 0 : index
    %92 = vector.load %arg13[%c0_55, %c0_56] : memref<32x16xf32, #tpu.memory_space<vmem>>, vector<32x16xf32>
    %cst_57 = arith.constant dense<0.000000e+00> : vector<8x16xf32>
    %93 = tpu.matmul %91, %92, %cst_57 {dimension_numbers = #tpu.dot_dimension_numbers<[1], [0], [0], [1], [0, 0, 1, 1], [], []>} : vector<8x32xf32>, vector<32x16xf32>, vector<8x16xf32> -> vector<8x16xf32>
    %c0_58 = arith.constant 0 : index
    %c0_59 = arith.constant 0 : index
    %94 = vector.load %arg14[%c0_58, %c0_59] : memref<1x16xf32, #tpu.memory_space<vmem>>, vector<1x16xf32>
    %95 = vector.broadcast %94 : vector<1x16xf32> to vector<8x16xf32>
    %96 = arith.addf %93, %95 : vector<8x16xf32>
    %97 = tpu.iota {dimensions = array<i32: 0>} : vector<8x16xi32>
    %c4_i32 = arith.constant 4 : i32
    %98 = vector.broadcast %c4_i32 : i32 to vector<8x16xi32>
    %99 = arith.cmpi slt, %97, %98 : vector<8x16xi32>
    %100 = arith.extui %99 : vector<8x16xi1> to vector<8x16xi32>
    %101 = arith.sitofp %100 : vector<8x16xi32> to vector<8x16xf32>
    %102 = arith.mulf %96, %101 : vector<8x16xf32>
    %cst_60 = arith.constant dense<0.000000e+00> : vector<16xf32>
    %103 = vector.multi_reduction <add>, %102, %cst_60 [0] : vector<8x16xf32> to vector<16xf32>
    %104 = vector.shape_cast %103 : vector<16xf32> to vector<1x16xf32>
    %cst_61 = arith.constant 2.500000e-01 : f32
    %105 = vector.broadcast %cst_61 : f32 to vector<1x16xf32>
    %106 = arith.mulf %104, %105 : vector<1x16xf32>
    %c0_62 = arith.constant 0 : index
    %c0_63 = arith.constant 0 : index
    %107 = vector.load %arg15[%c0_62, %c0_63] : memref<1x16xf32, #tpu.memory_space<vmem>>, vector<1x16xf32>
    tpu.vector_store %arg15[%c0_62, %c0_63], %106 {strides = array<i32>} : memref<1x16xf32, #tpu.memory_space<vmem>>, vector<1x16xf32>,
    %108 = vector.broadcast %106 : vector<1x16xf32> to vector<8x16xf32>
    %109 = arith.subf %96, %108 : vector<8x16xf32>
    %110 = arith.mulf %109, %109 : vector<8x16xf32>
    %cst_64 = arith.constant dense<0.000000e+00> : vector<8xf32>
    %111 = vector.multi_reduction <add>, %110, %cst_64 [1] : vector<8x16xf32> to vector<8xf32>
    %112 = vector.shape_cast %111 : vector<8xf32> to vector<8x1xf32>
    %113 = math.sqrt %112 : vector<8x1xf32>
    %cst_65 = arith.constant 0.000000e+00 : f32
    %114 = vector.broadcast %cst_65 : f32 to vector<8x1xf32>
    %115 = arith.subf %114, %113 : vector<8x1xf32>
    %cst_66 = arith.constant 0.693147182 : f32
    %116 = vector.broadcast %cst_66 : f32 to vector<8x1xf32>
    %117 = arith.mulf %115, %116 : vector<8x1xf32>
    %118 = math.exp %117 : vector<8x1xf32>
    %c0_67 = arith.constant 0 : index
    %c0_68 = arith.constant 0 : index
    %119 = vector.load %arg16[%c0_67, %c0_68] : memref<8x1xf32, #tpu.memory_space<vmem>>, vector<8x1xf32>
    tpu.vector_store %arg16[%c0_67, %c0_68], %118 {strides = array<i32>} : memref<8x1xf32, #tpu.memory_space<vmem>>, vector<8x1xf32>,
    return
  }
}

</mosaic_0001>

<llo_original>
// kernel: _forward_impl.1
$region0: #{_forward_impl.1}
  #allocation0 [shape = 'u32[]', space=smem, size = 0x4, offset = 0x4, fixed_abs, tag = 'smem constant byte address 0x4 - core index']
  #allocation1 [shape = 'u32[144,128]{1,0:T(1,128)}', space=vmem, size = 0x12000, scoped, tag = 'internal scratch']
  %s0 = inlined_call_operand.vmem [shape: f32[8,512], index: 0, kind: input, shape index: {}]
  %s1 = inlined_call_operand.vmem [shape: f32[8,8,16], index: 1, kind: input, shape index: {}]
  %s2 = inlined_call_operand.vmem [shape: f32[16,16], index: 2, kind: input, shape index: {}]
  %s3 = inlined_call_operand.vmem [shape: f32[1,16], index: 3, kind: input, shape index: {}]
  %s4 = inlined_call_operand.vmem [shape: f32[512,16], index: 4, kind: input, shape index: {}]
  %s5 = inlined_call_operand.vmem [shape: f32[1,16], index: 5, kind: input, shape index: {}]
  %s6 = inlined_call_operand.vmem [shape: f32[16,32], index: 6, kind: input, shape index: {}]
  %s7 = inlined_call_operand.vmem [shape: f32[16,32], index: 7, kind: input, shape index: {}]
  %s8 = inlined_call_operand.vmem [shape: f32[1,32], index: 8, kind: input, shape index: {}]
  %s9 = inlined_call_operand.vmem [shape: f32[1,32,32], index: 9, kind: input, shape index: {}]
  %s10 = inlined_call_operand.vmem [shape: f32[1,1,32], index: 10, kind: input, shape index: {}]
  %s11 = inlined_call_operand.vmem [shape: f32[2,1,32], index: 11, kind: input, shape index: {}]
  %s12 = inlined_call_operand.vmem [shape: f32[2,1,32], index: 12, kind: input, shape index: {}]
  %s13 = inlined_call_operand.vmem [shape: f32[32,16], index: 13, kind: input, shape index: {}]
  %s14 = inlined_call_operand.vmem [shape: f32[1,16], index: 14, kind: input, shape index: {}]
  %s15 = inlined_call_operand.hbm [shape: f32[1,16], index: 15, kind: output, shape index: {0}]
  %s16 = inlined_call_operand.vmem [shape: f32[8,1], index: 16, kind: output, shape index: {1}]
  %17 = xla_tuple %s15, %s16
  %s18 = sld [smem:[#allocation0]]
  $region78: #{_forward_impl.1} parent=0
    _
  %s20 = ssub.s32 1, %s18
  %s21 = scalar_select 0, %s20, %s18
  $region1: #{_forward_impl.1} parent=0
    #allocation2 [shape = 'u8[512]{0}', space=vmem, size = 0x400, scoped, tag = 'output window, operand 0, single buffered']
    #allocation3 [shape = 's32[1]{0}', space=sflag, size = 0x4, scoped, tag = 'scoped memory for _forward_impl.1']
    %22 = vsyncpa [#allocation3], 0
    // Predicated region
    $region2: #{_forward_impl.1} parent=1 // pred_check
      _
    $region3: #{_forward_impl.1} parent=1 // pred_check_branch
      %24 = sbr.rel (0) target = $region5
    $region4: #{_forward_impl.1} parent=1 // pred_region
      _
    $region5: #{_forward_impl.1} parent=1 // pred_fallthru
      _
    // Predicated region
    $region6: #{_forward_impl.1} parent=1 // pred_check
      _
    $region7: #{_forward_impl.1} parent=1 // pred_check_branch
      %26 = sbr.rel (0) target = $region9
    $region8: #{_forward_impl.1} parent=1 // pred_region
      _
    $region9: #{_forward_impl.1} parent=1 // pred_fallthru
      _
    // Predicated region
    $region10: #{_forward_impl.1} parent=1 // pred_check
      _
    $region11: #{_forward_impl.1} parent=1 // pred_check_branch
      %28 = sbr.rel (0) target = $region13
    $region12: #{_forward_impl.1} parent=1 // pred_region
      _
    $region13: #{_forward_impl.1} parent=1 // pred_fallthru
      _
    // Predicated region
    $region14: #{_forward_impl.1} parent=1 // pred_check
      _
    $region15: #{_forward_impl.1} parent=1 // pred_check_branch
      %30 = sbr.rel (0) target = $region17
    $region16: #{_forward_impl.1} parent=1 // pred_region
      _
    $region17: #{_forward_impl.1} parent=1 // pred_fallthru
      _
    // Predicated region
    $region18: #{_forward_impl.1} parent=1 // pred_check
      _
    $region19: #{_forward_impl.1} parent=1 // pred_check_branch
      %32 = sbr.rel (0) target = $region21
    $region20: #{_forward_impl.1} parent=1 // pred_region
      _
    $region21: #{_forward_impl.1} parent=1 // pred_fallthru
      _
    // Predicated region
    $region22: #{_forward_impl.1} parent=1 // pred_check
      _
    $region23: #{_forward_impl.1} parent=1 // pred_check_branch
      %34 = sbr.rel (0) target = $region25
    $region24: #{_forward_impl.1} parent=1 // pred_region
      _
    $region25: #{_forward_impl.1} parent=1 // pred_fallthru
      _
    // Predicated region
    $region26: #{_forward_impl.1} parent=1 // pred_check
      _
    $region27: #{_forward_impl.1} parent=1 // pred_check_branch
      %36 = sbr.rel (0) target = $region29
    $region28: #{_forward_impl.1} parent=1 // pred_region
      _
    $region29: #{_forward_impl.1} parent=1 // pred_fallthru
      _
    // Predicated region
    $region30: #{_forward_impl.1} parent=1 // pred_check
      _
    $region31: #{_forward_impl.1} parent=1 // pred_check_branch
      %38 = sbr.rel (0) target = $region33
    $region32: #{_forward_impl.1} parent=1 // pred_region
      _
    $region33: #{_forward_impl.1} parent=1 // pred_fallthru
      _
    // Predicated region
    $region34: #{_forward_impl.1} parent=1 // pred_check
      _
    $region35: #{_forward_impl.1} parent=1 // pred_check_branch
      %40 = sbr.rel (0) target = $region37
    $region36: #{_forward_impl.1} parent=1 // pred_region
      _
    $region37: #{_forward_impl.1} parent=1 // pred_fallthru
      _
    // Predicated region
    $region38: #{_forward_impl.1} parent=1 // pred_check
      _
    $region39: #{_forward_impl.1} parent=1 // pred_check_branch
      %42 = sbr.rel (0) target = $region41
    $region40: #{_forward_impl.1} parent=1 // pred_region
      _
    $region41: #{_forward_impl.1} parent=1 // pred_fallthru
      _
    // Predicated region
    $region42: #{_forward_impl.1} parent=1 // pred_check
      _
    $region43: #{_forward_impl.1} parent=1 // pred_check_branch
      %44 = sbr.rel (0) target = $region45
    $region44: #{_forward_impl.1} parent=1 // pred_region
      _
    $region45: #{_forward_impl.1} parent=1 // pred_fallthru
      _
    // Predicated region
    $region46: #{_forward_impl.1} parent=1 // pred_check
      _
    $region47: #{_forward_impl.1} parent=1 // pred_check_branch
      %46 = sbr.rel (0) target = $region49
    $region48: #{_forward_impl.1} parent=1 // pred_region
      _
    $region49: #{_forward_impl.1} parent=1 // pred_fallthru
      _
    // Predicated region
    $region50: #{_forward_impl.1} parent=1 // pred_check
      _
    $region51: #{_forward_impl.1} parent=1 // pred_check_branch
      %48 = sbr.rel (0) target = $region53
    $region52: #{_forward_impl.1} parent=1 // pred_region
      _
    $region53: #{_forward_impl.1} parent=1 // pred_fallthru
      _
    // Predicated region
    $region54: #{_forward_impl.1} parent=1 // pred_check
      _
    $region55: #{_forward_impl.1} parent=1 // pred_check_branch
      %50 = sbr.rel (0) target = $region57
    $region56: #{_forward_impl.1} parent=1 // pred_region
      _
    $region57: #{_forward_impl.1} parent=1 // pred_fallthru
      _
    // Predicated region
    $region58: #{_forward_impl.1} parent=1 // pred_check
      _
    $region59: #{_forward_impl.1} parent=1 // pred_check_branch
      %52 = sbr.rel (0) target = $region61
    $region60: #{_forward_impl.1} parent=1 // pred_region
      _
    $region61: #{_forward_impl.1} parent=1 // pred_fallthru
      _
    %v53 = vld [vmem:[%s1] sm:$0xff]
    %v54 = vld [vmem:[%s1 + $0x8] sm:$0xff]
    %v55 = vld [vmem:[%s1 + $0x10] sm:$0xff]
    %v56 = vld [vmem:[%s1 + $0x18] sm:$0xff]
    %v57 = vld [vmem:[%s1 + $0x20] sm:$0xff]
    %v58 = vld [vmem:[%s1 + $0x28] sm:$0xff]
    %v59 = vld [vmem:[%s1 + $0x30] sm:$0xff]
    %v60 = vld [vmem:[%s1 + $0x38] sm:$0xff]
    %vm61 = vcmask 130048
    %v62 = vsel %vm61, %v53, 0.0
    %v63 = vrot.slane %v62, 4
    %v64 = vadd.f32 %v62, %v63
    %v65 = vrot.slane %v64, 2
    %v66 = vadd.f32 %v64, %v65
    %v67 = vrot.slane %v66, 1
    %v68 = vadd.f32 %v66, %v67
    %v69 = vsel %vm61, %v54, 0.0
    %v70 = vrot.slane %v69, 4
    %v71 = vadd.f32 %v69, %v70
    %v72 = vrot.slane %v71, 2
    %v73 = vadd.f32 %v71, %v72
    %v74 = vrot.slane %v73, 1
    %v75 = vadd.f32 %v73, %v74
    %v76 = vsel %vm61, %v55, 0.0
    %v77 = vrot.slane %v76, 4
    %v78 = vadd.f32 %v76, %v77
    %v79 = vrot.slane %v78, 2
    %v80 = vadd.f32 %v78, %v79
    %v81 = vrot.slane %v80, 1
    %v82 = vadd.f32 %v80, %v81
    %v83 = vsel %vm61, %v56, 0.0
    %v84 = vrot.slane %v83, 4
    %v85 = vadd.f32 %v83, %v84
    %v86 = vrot.slane %v85, 2
    %v87 = vadd.f32 %v85, %v86
    %v88 = vrot.slane %v87, 1
    %v89 = vadd.f32 %v87, %v88
    %v90 = vsel %vm61, %v57, 0.0
    %v91 = vrot.slane %v90, 4
    %v92 = vadd.f32 %v90, %v91
    %v93 = vrot.slane %v92, 2
    %v94 = vadd.f32 %v92, %v93
    %v95 = vrot.slane %v94, 1
    %v96 = vadd.f32 %v94, %v95
    %v97 = vsel %vm61, %v58, 0.0
    %v98 = vrot.slane %v97, 4
    %v99 = vadd.f32 %v97, %v98
    %v100 = vrot.slane %v99, 2
    %v101 = vadd.f32 %v99, %v100
    %v102 = vrot.slane %v101, 1
    %v103 = vadd.f32 %v101, %v102
    %v104 = vsel %vm61, %v59, 0.0
    %v105 = vrot.slane %v104, 4
    %v106 = vadd.f32 %v104, %v105
    %v107 = vrot.slane %v106, 2
    %v108 = vadd.f32 %v106, %v107
    %v109 = vrot.slane %v108, 1
    %v110 = vadd.f32 %v108, %v109
    %v111 = vsel %vm61, %v60, 0.0
    %v112 = vrot.slane %v111, 4
    %v113 = vadd.f32 %v111, %v112
    %v114 = vrot.slane %v113, 2
    %v115 = vadd.f32 %v113, %v114
    %v116 = vrot.slane %v115, 1
    %v117 = vadd.f32 %v115, %v116
    %v118 = vrcp.pop 8.0
    %v119 = vmul.f32 %v68, %v118
    %v120 = vmul.f32 %v75, %v118
    %v121 = vmul.f32 %v82, %v118
    %v122 = vmul.f32 %v89, %v118
    %v123 = vmul.f32 %v96, %v118
    %v124 = vmul.f32 %v103, %v118
    %v125 = vmul.f32 %v110, %v118
    %v126 = vmul.f32 %v117, %v118
    %v127 = vld [vmem:[%s2] sm:$0xff]
    %v128 = vld [vmem:[%s2 + $0x8] sm:$0xff]
    %v129 = vld [vmem:[%s3] sm:$0x1]
    %v131 = vlaneseq
    %v132 = vshrl.u32 %v131, 7
    %v133 = vsub.s32 0, %v132
    %v134 = vrot.slane %v129, %v133
    %vm144 = vcmask 1041409
    %v145 = vsel %vm144, %v120, %v119
    %vm146 = vcmask 1042434
    %v147 = vsel %vm146, %v121, %v145
    %vm148 = vcmask 1043459
    %v149 = vsel %vm148, %v122, %v147
    %vm150 = vcmask 1044484
    %v151 = vsel %vm150, %v123, %v149
    %vm152 = vcmask 1045509
    %v153 = vsel %vm152, %v124, %v151
    %vm154 = vcmask 1046534
    %v155 = vsel %vm154, %v125, %v153
    %vm156 = vcmask 1047559
    %v157 = vsel %vm156, %v126, %v155
    %v158 = vsel %vm61, %v157, 0
    %160 = vmatprep.subr.mxu0 0.0
    %161 = vmatpush1.msra.mxu0 %v127
    %162 = vmatprep.subr.mxu0 0.0
    %163 = vmatpush1.msra.mxu0 %v128
    %164 = vmatprep.subr.mxu0 0.0
    %165 = vmatpush1.msra.mxu0 0.0
    %166 = vmatprep.subr.mxu0 0.0
    %167 = vmatpush1.msra.mxu0 0.0
    %168 = vmatprep.subr.mxu0 0.0
    %169 = vmatpush1.msra.mxu0 0.0
    %170 = vmatprep.subr.mxu0 0.0
    %171 = vmatpush1.msra.mxu0 0.0
    %172 = vmatprep.subr.mxu0 0.0
    %173 = vmatpush1.msra.mxu0 0.0
    %174 = vmatprep.subr.mxu0 0.0
    %175 = vmatpush1.msra.mxu0 0.0
    %176 = vmatprep.subr.mxu0 0.0
    %177 = vmatpush1.msra.mxu0 0.0
    %178 = vmatprep.subr.mxu0 0.0
    %179 = vmatpush1.msra.mxu0 0.0
    %180 = vmatprep.subr.mxu0 0.0
    %181 = vmatpush1.msra.mxu0 0.0
    %182 = vmatprep.subr.mxu0 0.0
    %183 = vmatpush1.msra.mxu0 0.0
    %184 = vmatprep.subr.mxu0 0.0
    %185 = vmatpush1.msra.mxu0 0.0
    %186 = vmatprep.subr.mxu0 0.0
    %187 = vmatpush1.msra.mxu0 0.0
    %188 = vmatprep.subr.mxu0 0.0
    %189 = vmatpush1.msra.mxu0 0.0
    %190 = vmatprep.subr.mxu0 0.0
    %191 = vmatpush1.msra.mxu0 0.0
    %192 = vmatprep.subr.mxu0 0.0
    %193 = vmatpush1.msra.mxu0 0.0
    %194 = vmatprep.subr.mxu0 0.0
    %195 = vmatpush1.msra.mxu0 0.0
    %196 = vmatprep.subr.mxu0 0.0
    %197 = vmatpush1.msra.mxu0 0.0
    %198 = vmatprep.subr.mxu0 0.0
    %199 = vmatpush1.msra.mxu0 0.0
    %200 = vmatprep.subr.mxu0 0.0
    %201 = vmatpush1.msra.mxu0 0.0
    %202 = vmatprep.subr.mxu0 0.0
    %203 = vmatpush1.msra.mxu0 0.0
    %204 = vmatprep.subr.mxu0 0.0
    %205 = vmatpush1.msra.mxu0 0.0
    %206 = vmatprep.subr.mxu0 0.0
    %207 = vmatpush1.msra.mxu0 0.0
    %208 = vmatprep.subr.mxu0 0.0
    %209 = vmatpush1.msra.mxu0 0.0
    %210 = vmatprep.subr.mxu0 0.0
    %211 = vmatpush1.msra.mxu0 0.0
    %212 = vmatprep.subr.mxu0 0.0
    %213 = vmatpush1.msra.mxu0 0.0
    %214 = vmatprep.subr.mxu0 0.0
    %215 = vmatpush1.msra.mxu0 0.0
    %216 = vmatprep.subr.mxu0 0.0
    %217 = vmatpush1.msra.mxu0 0.0
    %218 = vmatprep.subr.mxu0 0.0
    %219 = vmatpush1.msra.mxu0 0.0
    %220 = vmatprep.subr.mxu0 0.0
    %221 = vmatpush1.msra.mxu0 0.0
    %222 = vmatprep.subr.mxu0 0.0
    %223 = vmatpush1.msra.mxu0 0.0
    %224 = vmatprep.mubr.f32.mxu0 0.0
    %225 = vmatmul.mubr.f32.gmra.mrb[0].mxu0 %v158
    %v226 = vpop.f32.mrb[0].mxu0
    %v227 = vadd.f32 %v134, %v226
    %v228 = vpop.f32.mrb[0].mxu0
    %229 = vdwg.mxu0
    %v230 = vld [vmem:[%s0] sm:$0xff]
    %v231 = vld [vmem:[%s0 + $0x8] sm:$0xff]
    %v232 = vld [vmem:[%s0 + $0x10] sm:$0xff]
    %v233 = vld [vmem:[%s0 + $0x18] sm:$0xff]
    %v234 = vld [vmem:[%s4] sm:$0xff]
    %v235 = vld [vmem:[%s4 + $0x8] sm:$0xff]
    %v236 = vld [vmem:[%s4 + $0x10] sm:$0xff]
    %v237 = vld [vmem:[%s4 + $0x18] sm:$0xff]
    %v238 = vld [vmem:[%s4 + $0x20] sm:$0xff]
    %v239 = vld [vmem:[%s4 + $0x28] sm:$0xff]
    %v240 = vld [vmem:[%s4 + $0x30] sm:$0xff]
    %v241 = vld [vmem:[%s4 + $0x38] sm:$0xff]
    %v242 = vld [vmem:[%s4 + $0x40] sm:$0xff]
    %v243 = vld [vmem:[%s4 + $0x48] sm:$0xff]
    %v244 = vld [vmem:[%s4 + $0x50] sm:$0xff]
    %v245 = vld [vmem:[%s4 + $0x58] sm:$0xff]
    %v246 = vld [vmem:[%s4 + $0x60] sm:$0xff]
    %v247 = vld [vmem:[%s4 + $0x68] sm:$0xff]
    %v248 = vld [vmem:[%s4 + $0x70] sm:$0xff]
    %v249 = vld [vmem:[%s4 + $0x78] sm:$0xff]
    %v250 = vld [vmem:[%s4 + $0x80] sm:$0xff]
    %v251 = vld [vmem:[%s4 + $0x88] sm:$0xff]
    %v252 = vld [vmem:[%s4 + $0x90] sm:$0xff]
    %v253 = vld [vmem:[%s4 + $0x98] sm:$0xff]
    %v254 = vld [vmem:[%s4 + $0xa0] sm:$0xff]
    %v255 = vld [vmem:[%s4 + $0xa8] sm:$0xff]
    %v256 = vld [vmem:[%s4 + $0xb0] sm:$0xff]
    %v257 = vld [vmem:[%s4 + $0xb8] sm:$0xff]
    %v258 = vld [vmem:[%s4 + $0xc0] sm:$0xff]
    %v259 = vld [vmem:[%s4 + $0xc8] sm:$0xff]
    %v260 = vld [vmem:[%s4 + $0xd0] sm:$0xff]
    %v261 = vld [vmem:[%s4 + $0xd8] sm:$0xff]
    %v262 = vld [vmem:[%s4 + $0xe0] sm:$0xff]
    %v263 = vld [vmem:[%s4 + $0xe8] sm:$0xff]
    %v264 = vld [vmem:[%s4 + $0xf0] sm:$0xff]
    %v265 = vld [vmem:[%s4 + $0xf8] sm:$0xff]
    %v266 = vld [vmem:[%s4 + $0x100] sm:$0xff]
    %v267 = vld [vmem:[%s4 + $0x108] sm:$0xff]
    %v268 = vld [vmem:[%s4 + $0x110] sm:$0xff]
    %v269 = vld [vmem:[%s4 + $0x118] sm:$0xff]
    %v270 = vld [vmem:[%s4 + $0x120] sm:$0xff]
    %v271 = vld [vmem:[%s4 + $0x128] sm:$0xff]
    %v272 = vld [vmem:[%s4 + $0x130] sm:$0xff]
    %v273 = vld [vmem:[%s4 + $0x138] sm:$0xff]
    %v274 = vld [vmem:[%s4 + $0x140] sm:$0xff]
    %v275 = vld [vmem:[%s4 + $0x148] sm:$0xff]
    %v276 = vld [vmem:[%s4 + $0x150] sm:$0xff]
    %v277 = vld [vmem:[%s4 + $0x158] sm:$0xff]
    %v278 = vld [vmem:[%s4 + $0x160] sm:$0xff]
    %v279 = vld [vmem:[%s4 + $0x168] sm:$0xff]
    %v280 = vld [vmem:[%s4 + $0x170] sm:$0xff]
    %v281 = vld [vmem:[%s4 + $0x178] sm:$0xff]
    %v282 = vld [vmem:[%s4 + $0x180] sm:$0xff]
    %v283 = vld [vmem:[%s4 + $0x188] sm:$0xff]
    %v284 = vld [vmem:[%s4 + $0x190] sm:$0xff]
    %v285 = vld [vmem:[%s4 + $0x198] sm:$0xff]
    %v286 = vld [vmem:[%s4 + $0x1a0] sm:$0xff]
    %v287 = vld [vmem:[%s4 + $0x1a8] sm:$0xff]
    %v288 = vld [vmem:[%s4 + $0x1b0] sm:$0xff]
    %v289 = vld [vmem:[%s4 + $0x1b8] sm:$0xff]
    %v290 = vld [vmem:[%s4 + $0x1c0] sm:$0xff]
    %v291 = vld [vmem:[%s4 + $0x1c8] sm:$0xff]
    %v292 = vld [vmem:[%s4 + $0x1d0] sm:$0xff]
    %v293 = vld [vmem:[%s4 + $0x1d8] sm:$0xff]
    %v294 = vld [vmem:[%s4 + $0x1e0] sm:$0xff]
    %v295 = vld [vmem:[%s4 + $0x1e8] sm:$0xff]
    %v296 = vld [vmem:[%s4 + $0x1f0] sm:$0xff]
    %v297 = vld [vmem:[%s4 + $0x1f8] sm:$0xff]
    %v298 = vld [vmem:[%s5] sm:$0x1]
    %v300 = vlaneseq
    %v301 = vshrl.u32 %v300, 7
    %v302 = vsub.s32 0, %v301
    %v303 = vrot.slane %v298, %v302
    %305 = vmatprep.subr.mxu0 0.0
    %306 = vmatpush1.msra.mxu0 %v234
    %307 = vmatprep.subr.mxu0 0.0
    %308 = vmatpush1.msra.mxu0 %v235
    %309 = vmatprep.subr.mxu0 0.0
    %310 = vmatpush1.msra.mxu0 %v236
    %311 = vmatprep.subr.mxu0 0.0
    %312 = vmatpush1.msra.mxu0 %v237
    %313 = vmatprep.subr.mxu0 0.0
    %314 = vmatpush1.msra.mxu0 %v238
    %315 = vmatprep.subr.mxu0 0.0
    %316 = vmatpush1.msra.mxu0 %v239
    %317 = vmatprep.subr.mxu0 0.0
    %318 = vmatpush1.msra.mxu0 %v240
    %319 = vmatprep.subr.mxu0 0.0
    %320 = vmatpush1.msra.mxu0 %v241
    %321 = vmatprep.subr.mxu0 0.0
    %322 = vmatpush1.msra.mxu0 %v242
    %323 = vmatprep.subr.mxu0 0.0
    %324 = vmatpush1.msra.mxu0 %v243
    %325 = vmatprep.subr.mxu0 0.0
    %326 = vmatpush1.msra.mxu0 %v244
    %327 = vmatprep.subr.mxu0 0.0
    %328 = vmatpush1.msra.mxu0 %v245
    %329 = vmatprep.subr.mxu0 0.0
    %330 = vmatpush1.msra.mxu0 %v246
    %331 = vmatprep.subr.mxu0 0.0
    %332 = vmatpush1.msra.mxu0 %v247
    %333 = vmatprep.subr.mxu0 0.0
    %334 = vmatpush1.msra.mxu0 %v248
    %335 = vmatprep.subr.mxu0 0.0
    %336 = vmatpush1.msra.mxu0 %v249
    %337 = vmatprep.subr.mxu0 0.0
    %338 = vmatpush1.msra.mxu0 %v250
    %339 = vmatprep.subr.mxu0 0.0
    %340 = vmatpush1.msra.mxu0 %v251
    %341 = vmatprep.subr.mxu0 0.0
    %342 = vmatpush1.msra.mxu0 %v252
    %343 = vmatprep.subr.mxu0 0.0
    %344 = vmatpush1.msra.mxu0 %v253
    %345 = vmatprep.subr.mxu0 0.0
    %346 = vmatpush1.msra.mxu0 %v254
    %347 = vmatprep.subr.mxu0 0.0
    %348 = vmatpush1.msra.mxu0 %v255
    %349 = vmatprep.subr.mxu0 0.0
    %350 = vmatpush1.msra.mxu0 %v256
    %351 = vmatprep.subr.mxu0 0.0
    %352 = vmatpush1.msra.mxu0 %v257
    %353 = vmatprep.subr.mxu0 0.0
    %354 = vmatpush1.msra.mxu0 %v258
    %355 = vmatprep.subr.mxu0 0.0
    %356 = vmatpush1.msra.mxu0 %v259
    %357 = vmatprep.subr.mxu0 0.0
    %358 = vmatpush1.msra.mxu0 %v260
    %359 = vmatprep.subr.mxu0 0.0
    %360 = vmatpush1.msra.mxu0 %v261
    %361 = vmatprep.subr.mxu0 0.0
    %362 = vmatpush1.msra.mxu0 %v262
    %363 = vmatprep.subr.mxu0 0.0
    %364 = vmatpush1.msra.mxu0 %v263
    %365 = vmatprep.subr.mxu0 0.0
    %366 = vmatpush1.msra.mxu0 %v264
    %367 = vmatprep.subr.mxu0 0.0
    %368 = vmatpush1.msra.mxu0 %v265
    %369 = vmatprep.mubr.f32.mxu0 %v231
    %370 = vmatmul.mubr.f32.gmra.mrb[0].mxu0 %v230
    %v371 = vpop.f32.mrb[0].mxu0
    %v372 = vadd.f32 %v303, %v371
    %v373 = vpop.f32.mrb[0].mxu0
    %374 = vdwg.mxu0
    %375 = vmatprep.subr.mxu0 0.0
    %376 = vmatpush1.msra.mxu0 %v266
    %377 = vmatprep.subr.mxu0 0.0
    %378 = vmatpush1.msra.mxu0 %v267
    %379 = vmatprep.subr.mxu0 0.0
    %380 = vmatpush1.msra.mxu0 %v268
    %381 = vmatprep.subr.mxu0 0.0
    %382 = vmatpush1.msra.mxu0 %v269
    %383 = vmatprep.subr.mxu0 0.0
    %384 = vmatpush1.msra.mxu0 %v270
    %385 = vmatprep.subr.mxu0 0.0
    %386 = vmatpush1.msra.mxu0 %v271
    %387 = vmatprep.subr.mxu0 0.0
    %388 = vmatpush1.msra.mxu0 %v272
    %389 = vmatprep.subr.mxu0 0.0
    %390 = vmatpush1.msra.mxu0 %v273
    %391 = vmatprep.subr.mxu0 0.0
    %392 = vmatpush1.msra.mxu0 %v274
    %393 = vmatprep.subr.mxu0 0.0
    %394 = vmatpush1.msra.mxu0 %v275
    %395 = vmatprep.subr.mxu0 0.0
    %396 = vmatpush1.msra.mxu0 %v276
    %397 = vmatprep.subr.mxu0 0.0
    %398 = vmatpush1.msra.mxu0 %v277
    %399 = vmatprep.subr.mxu0 0.0
    %400 = vmatpush1.msra.mxu0 %v278
    %401 = vmatprep.subr.mxu0 0.0
    %402 = vmatpush1.msra.mxu0 %v279
    %403 = vmatprep.subr.mxu0 0.0
    %404 = vmatpush1.msra.mxu0 %v280
    %405 = vmatprep.subr.mxu0 0.0
    %406 = vmatpush1.msra.mxu0 %v281
    %407 = vmatprep.subr.mxu0 0.0
    %408 = vmatpush1.msra.mxu0 %v282
    %409 = vmatprep.subr.mxu0 0.0
    %410 = vmatpush1.msra.mxu0 %v283
    %411 = vmatprep.subr.mxu0 0.0
    %412 = vmatpush1.msra.mxu0 %v284
    %413 = vmatprep.subr.mxu0 0.0
    %414 = vmatpush1.msra.mxu0 %v285
    %415 = vmatprep.subr.mxu0 0.0
    %416 = vmatpush1.msra.mxu0 %v286
    %417 = vmatprep.subr.mxu0 0.0
    %418 = vmatpush1.msra.mxu0 %v287
    %419 = vmatprep.subr.mxu0 0.0
    %420 = vmatpush1.msra.mxu0 %v288
    %421 = vmatprep.subr.mxu0 0.0
    %422 = vmatpush1.msra.mxu0 %v289
    %423 = vmatprep.subr.mxu0 0.0
    %424 = vmatpush1.msra.mxu0 %v290
    %425 = vmatprep.subr.mxu0 0.0
    %426 = vmatpush1.msra.mxu0 %v291
    %427 = vmatprep.subr.mxu0 0.0
    %428 = vmatpush1.msra.mxu0 %v292
    %429 = vmatprep.subr.mxu0 0.0
    %430 = vmatpush1.msra.mxu0 %v293
    %431 = vmatprep.subr.mxu0 0.0
    %432 = vmatpush1.msra.mxu0 %v294
    %433 = vmatprep.subr.mxu0 0.0
    %434 = vmatpush1.msra.mxu0 %v295
    %435 = vmatprep.subr.mxu0 0.0
    %436 = vmatpush1.msra.mxu0 %v296
    %437 = vmatprep.subr.mxu0 0.0
    %438 = vmatpush1.msra.mxu0 %v297
    %439 = vmatprep.mubr.f32.mxu0 %v233
    %440 = vmatmul.mubr.f32.gmra.mrb[0].mxu0 %v232
    %v441 = vpop.f32.mrb[0].mxu0
    %v442 = vadd.f32 %v372, %v441
    %v443 = vpop.f32.mrb[0].mxu0
    %444 = vdwg.mxu0
    %v445 = vld [vmem:[%s6] sm:$0xff]
    %v446 = vld [vmem:[%s6 + $0x8] sm:$0xff]
    %v447 = vld [vmem:[%s7] sm:$0xff]
    %v448 = vld [vmem:[%s7 + $0x8] sm:$0xff]
    %v450 = vsel %vm61, %v227, 0
    %452 = vmatprep.subr.mxu0 0.0
    %453 = vmatpush1.msra.mxu0 %v447
    %454 = vmatprep.subr.mxu0 0.0
    %455 = vmatpush1.msra.mxu0 %v448
    %456 = vmatprep.subr.mxu0 0.0
    %457 = vmatpush1.msra.mxu0 0.0
    %458 = vmatprep.subr.mxu0 0.0
    %459 = vmatpush1.msra.mxu0 0.0
    %460 = vmatprep.subr.mxu0 0.0
    %461 = vmatpush1.msra.mxu0 0.0
    %462 = vmatprep.subr.mxu0 0.0
    %463 = vmatpush1.msra.mxu0 0.0
    %464 = vmatprep.subr.mxu0 0.0
    %465 = vmatpush1.msra.mxu0 0.0
    %466 = vmatprep.subr.mxu0 0.0
    %467 = vmatpush1.msra.mxu0 0.0
    %468 = vmatprep.subr.mxu0 0.0
    %469 = vmatpush1.msra.mxu0 0.0
    %470 = vmatprep.subr.mxu0 0.0
    %471 = vmatpush1.msra.mxu0 0.0
    %472 = vmatprep.subr.mxu0 0.0
    %473 = vmatpush1.msra.mxu0 0.0
    %474 = vmatprep.subr.mxu0 0.0
    %475 = vmatpush1.msra.mxu0 0.0
    %476 = vmatprep.subr.mxu0 0.0
    %477 = vmatpush1.msra.mxu0 0.0
    %478 = vmatprep.subr.mxu0 0.0
    %479 = vmatpush1.msra.mxu0 0.0
    %480 = vmatprep.subr.mxu0 0.0
    %481 = vmatpush1.msra.mxu0 0.0
    %482 = vmatprep.subr.mxu0 0.0
    %483 = vmatpush1.msra.mxu0 0.0
    %484 = vmatprep.subr.mxu0 0.0
    %485 = vmatpush1.msra.mxu0 0.0
    %486 = vmatprep.subr.mxu0 0.0
    %487 = vmatpush1.msra.mxu0 0.0
    %488 = vmatprep.subr.mxu0 0.0
    %489 = vmatpush1.msra.mxu0 0.0
    %490 = vmatprep.subr.mxu0 0.0
    %491 = vmatpush1.msra.mxu0 0.0
    %492 = vmatprep.subr.mxu0 0.0
    %493 = vmatpush1.msra.mxu0 0.0
    %494 = vmatprep.subr.mxu0 0.0
    %495 = vmatpush1.msra.mxu0 0.0
    %496 = vmatprep.subr.mxu0 0.0
    %497 = vmatpush1.msra.mxu0 0.0
    %498 = vmatprep.subr.mxu0 0.0
    %499 = vmatpush1.msra.mxu0 0.0
    %500 = vmatprep.subr.mxu0 0.0
    %501 = vmatpush1.msra.mxu0 0.0
    %502 = vmatprep.subr.mxu0 0.0
    %503 = vmatpush1.msra.mxu0 0.0
    %504 = vmatprep.subr.mxu0 0.0
    %505 = vmatpush1.msra.mxu0 0.0
    %506 = vmatprep.subr.mxu0 0.0
    %507 = vmatpush1.msra.mxu0 0.0
    %508 = vmatprep.subr.mxu0 0.0
    %509 = vmatpush1.msra.mxu0 0.0
    %510 = vmatprep.subr.mxu0 0.0
    %511 = vmatpush1.msra.mxu0 0.0
    %512 = vmatprep.subr.mxu0 0.0
    %513 = vmatpush1.msra.mxu0 0.0
    %514 = vmatprep.subr.mxu0 0.0
    %515 = vmatpush1.msra.mxu0 0.0
    %516 = vmatprep.mubr.f32.mxu0 0.0
    %517 = vmatmul.mubr.f32.gmra.mrb[0].mxu0 %v450
    %v518 = vpop.f32.mrb[0].mxu0
    %v519 = vadd.f32 0.0, %v518
    %v520 = vpop.f32.mrb[0].mxu0
    %521 = vdwg.mxu0
    %v523 = vsel %vm61, %v442, 0
    %525 = vmatprep.subr.mxu0 0.0
    %526 = vmatpush1.msra.mxu0 %v445
    %527 = vmatprep.subr.mxu0 0.0
    %528 = vmatpush1.msra.mxu0 %v446
    %529 = vmatprep.subr.mxu0 0.0
    %530 = vmatpush1.msra.mxu0 0.0
    %531 = vmatprep.subr.mxu0 0.0
    %532 = vmatpush1.msra.mxu0 0.0
    %533 = vmatprep.subr.mxu0 0.0
    %534 = vmatpush1.msra.mxu0 0.0
    %535 = vmatprep.subr.mxu0 0.0
    %536 = vmatpush1.msra.mxu0 0.0
    %537 = vmatprep.subr.mxu0 0.0
    %538 = vmatpush1.msra.mxu0 0.0
    %539 = vmatprep.subr.mxu0 0.0
    %540 = vmatpush1.msra.mxu0 0.0
    %541 = vmatprep.subr.mxu0 0.0
    %542 = vmatpush1.msra.mxu0 0.0
    %543 = vmatprep.subr.mxu0 0.0
    %544 = vmatpush1.msra.mxu0 0.0
    %545 = vmatprep.subr.mxu0 0.0
    %546 = vmatpush1.msra.mxu0 0.0
    %547 = vmatprep.subr.mxu0 0.0
    %548 = vmatpush1.msra.mxu0 0.0
    %549 = vmatprep.subr.mxu0 0.0
    %550 = vmatpush1.msra.mxu0 0.0
    %551 = vmatprep.subr.mxu0 0.0
    %552 = vmatpush1.msra.mxu0 0.0
    %553 = vmatprep.subr.mxu0 0.0
    %554 = vmatpush1.msra.mxu0 0.0
    %555 = vmatprep.subr.mxu0 0.0
    %556 = vmatpush1.msra.mxu0 0.0
    %557 = vmatprep.subr.mxu0 0.0
    %558 = vmatpush1.msra.mxu0 0.0
    %559 = vmatprep.subr.mxu0 0.0
    %560 = vmatpush1.msra.mxu0 0.0
    %561 = vmatprep.subr.mxu0 0.0
    %562 = vmatpush1.msra.mxu0 0.0
    %563 = vmatprep.subr.mxu0 0.0
    %564 = vmatpush1.msra.mxu0 0.0
    %565 = vmatprep.subr.mxu0 0.0
    %566 = vmatpush1.msra.mxu0 0.0
    %567 = vmatprep.subr.mxu0 0.0
    %568 = vmatpush1.msra.mxu0 0.0
    %569 = vmatprep.subr.mxu0 0.0
    %570 = vmatpush1.msra.mxu0 0.0
    %571 = vmatprep.subr.mxu0 0.0
    %572 = vmatpush1.msra.mxu0 0.0
    %573 = vmatprep.subr.mxu0 0.0
    %574 = vmatpush1.msra.mxu0 0.0
    %575 = vmatprep.subr.mxu0 0.0
    %576 = vmatpush1.msra.mxu0 0.0
    %577 = vmatprep.subr.mxu0 0.0
    %578 = vmatpush1.msra.mxu0 0.0
    %579 = vmatprep.subr.mxu0 0.0
    %580 = vmatpush1.msra.mxu0 0.0
    %581 = vmatprep.subr.mxu0 0.0
    %582 = vmatpush1.msra.mxu0 0.0
    %583 = vmatprep.subr.mxu0 0.0
    %584 = vmatpush1.msra.mxu0 0.0
    %585 = vmatprep.subr.mxu0 0.0
    %586 = vmatpush1.msra.mxu0 0.0
    %587 = vmatprep.subr.mxu0 0.0
    %588 = vmatpush1.msra.mxu0 0.0
    %589 = vmatprep.mubr.f32.mxu0 0.0
    %590 = vmatmul.mubr.f32.gmra.mrb[0].mxu0 %v523
    %v591 = vpop.f32.mrb[0].mxu0
    %v592 = vadd.f32 %v519, %v591
    %v593 = vpop.f32.mrb[0].mxu0
    %594 = vdwg.mxu0
    %v595 = vld [vmem:[%s8] sm:$0x1]
    %v597 = vlaneseq
    %v598 = vshrl.u32 %v597, 7
    %v599 = vsub.s32 0, %v598
    %v600 = vrot.slane %v595, %v599
    %v602 = vadd.f32 %v592, %v600
    %vm603 = vcmp.gt.f32.partialorder %v602, 0.0
    %v604 = vmul.f32 %v602, 0.01
    %v605 = vsel %vm603, %v602, %v604
    %vm606 = vcmask 261120
    %v607 = vsel %vm606, %v605, 0.0
    %608 = vadd.xlane.f32.xlu0 %v607
    %v609 = vpop.xlane.xlu0 %608
    %v610 = vrcp.pop 32.0
    %v611 = vmul.f32 %v609, %v610
    %v612 = vmul.f32 %v605, %v605
    %v613 = vsel %vm606, %v612, 0.0
    %614 = vadd.xlane.f32.xlu0 %v613
    %v615 = vpop.xlane.xlu0 %614
    %v616 = vmul.f32 %v615, %v610
    %v617 = vmul.f32 %v611, %v611
    %v618 = vsub.f32 %v616, %v617
    %v619 = vsub.f32 %v605, %v611
    %v620 = vadd.f32 %v618, 1e-05
    %v621 = vrsqrt.pop %v620
    %v622 = vmul.f32 %v619, %v621
    %v623 = vld [vmem:[%s11] sm:$0x1]
    %v625 = vlaneseq
    %v626 = vshrl.u32 %v625, 7
    %v627 = vsub.s32 0, %v626
    %v628 = vrot.slane %v623, %v627
    %v630 = vmul.f32 %v622, %v628
    %v631 = vld [vmem:[%s12] sm:$0x1]
    %v633 = vlaneseq
    %v634 = vshrl.u32 %v633, 7
    %v635 = vsub.s32 0, %v634
    %v636 = vrot.slane %v631, %v635
    %v638 = vadd.f32 %v630, %v636
    %v639 = vld [vmem:[%s9] sm:$0xff]
    %v640 = vld [vmem:[%s9 + $0x8] sm:$0xff]
    %v641 = vld [vmem:[%s9 + $0x10] sm:$0xff]
    %v642 = vld [vmem:[%s9 + $0x18] sm:$0xff]
    %v643 = vld [vmem:[%s10] sm:$0x1]
    %v645 = vlaneseq
    %v646 = vshrl.u32 %v645, 7
    %v647 = vsub.s32 0, %v646
    %v648 = vrot.slane %v643, %v647
    %v651 = vsel %vm606, %v638, 0
    %653 = vmatprep.subr.mxu0 0.0
    %654 = vmatpush1.msra.mxu0 %v639
    %655 = vmatprep.subr.mxu0 0.0
    %656 = vmatpush1.msra.mxu0 %v640
    %657 = vmatprep.subr.mxu0 0.0
    %658 = vmatpush1.msra.mxu0 %v641
    %659 = vmatprep.subr.mxu0 0.0
    %660 = vmatpush1.msra.mxu0 %v642
    %661 = vmatprep.subr.mxu0 0.0
    %662 = vmatpush1.msra.mxu0 0.0
    %663 = vmatprep.subr.mxu0 0.0
    %664 = vmatpush1.msra.mxu0 0.0
    %665 = vmatprep.subr.mxu0 0.0
    %666 = vmatpush1.msra.mxu0 0.0
    %667 = vmatprep.subr.mxu0 0.0
    %668 = vmatpush1.msra.mxu0 0.0
    %669 = vmatprep.subr.mxu0 0.0
    %670 = vmatpush1.msra.mxu0 0.0
    %671 = vmatprep.subr.mxu0 0.0
    %672 = vmatpush1.msra.mxu0 0.0
    %673 = vmatprep.subr.mxu0 0.0
    %674 = vmatpush1.msra.mxu0 0.0
    %675 = vmatprep.subr.mxu0 0.0
    %676 = vmatpush1.msra.mxu0 0.0
    %677 = vmatprep.subr.mxu0 0.0
    %678 = vmatpush1.msra.mxu0 0.0
    %679 = vmatprep.subr.mxu0 0.0
    %680 = vmatpush1.msra.mxu0 0.0
    %681 = vmatprep.subr.mxu0 0.0
    %682 = vmatpush1.msra.mxu0 0.0
    %683 = vmatprep.subr.mxu0 0.0
    %684 = vmatpush1.msra.mxu0 0.0
    %685 = vmatprep.subr.mxu0 0.0
    %686 = vmatpush1.msra.mxu0 0.0
    %687 = vmatprep.subr.mxu0 0.0
    %688 = vmatpush1.msra.mxu0 0.0
    %689 = vmatprep.subr.mxu0 0.0
    %690 = vmatpush1.msra.mxu0 0.0
    %691 = vmatprep.subr.mxu0 0.0
    %692 = vmatpush1.msra.mxu0 0.0
    %693 = vmatprep.subr.mxu0 0.0
    %694 = vmatpush1.msra.mxu0 0.0
    %695 = vmatprep.subr.mxu0 0.0
    %696 = vmatpush1.msra.mxu0 0.0
    %697 = vmatprep.subr.mxu0 0.0
    %698 = vmatpush1.msra.mxu0 0.0
    %699 = vmatprep.subr.mxu0 0.0
    %700 = vmatpush1.msra.mxu0 0.0
    %701 = vmatprep.subr.mxu0 0.0
    %702 = vmatpush1.msra.mxu0 0.0
    %703 = vmatprep.subr.mxu0 0.0
    %704 = vmatpush1.msra.mxu0 0.0
    %705 = vmatprep.subr.mxu0 0.0
    %706 = vmatpush1.msra.mxu0 0.0
    %707 = vmatprep.subr.mxu0 0.0
    %708 = vmatpush1.msra.mxu0 0.0
    %709 = vmatprep.subr.mxu0 0.0
    %710 = vmatpush1.msra.mxu0 0.0
    %711 = vmatprep.subr.mxu0 0.0
    %712 = vmatpush1.msra.mxu0 0.0
    %713 = vmatprep.subr.mxu0 0.0
    %714 = vmatpush1.msra.mxu0 0.0
    %715 = vmatprep.subr.mxu0 0.0
    %716 = vmatpush1.msra.mxu0 0.0
    %717 = vmatprep.mubr.f32.mxu0 0.0
    %718 = vmatmul.mubr.f32.gmra.mrb[0].mxu0 %v651
    %v719 = vpop.f32.mrb[0].mxu0
    %v720 = vadd.f32 %v648, %v719
    %v721 = vpop.f32.mrb[0].mxu0
    %722 = vdwg.mxu0
    %vm723 = vcmp.gt.f32.partialorder %v720, 0.0
    %v724 = vmul.f32 %v720, 0.01
    %v725 = vsel %vm723, %v720, %v724
    %v726 = vsel %vm606, %v725, 0.0
    %727 = vadd.xlane.f32.xlu0 %v726
    %v728 = vpop.xlane.xlu0 %727
    %v729 = vmul.f32 %v728, %v610
    %v730 = vmul.f32 %v725, %v725
    %v731 = vsel %vm606, %v730, 0.0
    %732 = vadd.xlane.f32.xlu0 %v731
    %v733 = vpop.xlane.xlu0 %732
    %v734 = vmul.f32 %v733, %v610
    %v735 = vmul.f32 %v729, %v729
    %v736 = vsub.f32 %v734, %v735
    %v737 = vsub.f32 %v725, %v729
    %v738 = vadd.f32 %v736, 1e-05
    %v739 = vrsqrt.pop %v738
    %v740 = vmul.f32 %v737, %v739
    %s741 = scalar_lea.vmem %s11, 1
    %v742 = vld [vmem:[%s741] sm:$0x1]
    %v744 = vlaneseq
    %v745 = vshrl.u32 %v744, 7
    %v746 = vsub.s32 0, %v745
    %v747 = vrot.slane %v742, %v746
    %v749 = vmul.f32 %v740, %v747
    %s750 = scalar_lea.vmem %s12, 1
    %v751 = vld [vmem:[%s750] sm:$0x1]
    %v753 = vlaneseq
    %v754 = vshrl.u32 %v753, 7
    %v755 = vsub.s32 0, %v754
    %v756 = vrot.slane %v751, %v755
    %v758 = vadd.f32 %v749, %v756
    %v759 = vld [vmem:[%s13] sm:$0xff]
    %v760 = vld [vmem:[%s13 + $0x8] sm:$0xff]
    %v761 = vld [vmem:[%s13 + $0x10] sm:$0xff]
    %v762 = vld [vmem:[%s13 + $0x18] sm:$0xff]
    %v763 = vld [vmem:[%s14] sm:$0x1]
    %v765 = vlaneseq
    %v766 = vshrl.u32 %v765, 7
    %v767 = vsub.s32 0, %v766
    %v768 = vrot.slane %v763, %v767
    %v771 = vsel %vm606, %v758, 0
    %773 = vmatprep.subr.mxu0 0.0
    %774 = vmatpush1.msra.mxu0 %v759
    %775 = vmatprep.subr.mxu0 0.0
    %776 = vmatpush1.msra.mxu0 %v760
    %777 = vmatprep.subr.mxu0 0.0
    %778 = vmatpush1.msra.mxu0 %v761
    %779 = vmatprep.subr.mxu0 0.0
    %780 = vmatpush1.msra.mxu0 %v762
    %781 = vmatprep.subr.mxu0 0.0
    %782 = vmatpush1.msra.mxu0 0.0
    %783 = vmatprep.subr.mxu0 0.0
    %784 = vmatpush1.msra.mxu0 0.0
    %785 = vmatprep.subr.mxu0 0.0
    %786 = vmatpush1.msra.mxu0 0.0
    %787 = vmatprep.subr.mxu0 0.0
    %788 = vmatpush1.msra.mxu0 0.0
    %789 = vmatprep.subr.mxu0 0.0
    %790 = vmatpush1.msra.mxu0 0.0
    %791 = vmatprep.subr.mxu0 0.0
    %792 = vmatpush1.msra.mxu0 0.0
    %793 = vmatprep.subr.mxu0 0.0
    %794 = vmatpush1.msra.mxu0 0.0
    %795 = vmatprep.subr.mxu0 0.0
    %796 = vmatpush1.msra.mxu0 0.0
    %797 = vmatprep.subr.mxu0 0.0
    %798 = vmatpush1.msra.mxu0 0.0
    %799 = vmatprep.subr.mxu0 0.0
    %800 = vmatpush1.msra.mxu0 0.0
    %801 = vmatprep.subr.mxu0 0.0
    %802 = vmatpush1.msra.mxu0 0.0
    %803 = vmatprep.subr.mxu0 0.0
    %804 = vmatpush1.msra.mxu0 0.0
    %805 = vmatprep.subr.mxu0 0.0
    %806 = vmatpush1.msra.mxu0 0.0
    %807 = vmatprep.subr.mxu0 0.0
    %808 = vmatpush1.msra.mxu0 0.0
    %809 = vmatprep.subr.mxu0 0.0
    %810 = vmatpush1.msra.mxu0 0.0
    %811 = vmatprep.subr.mxu0 0.0
    %812 = vmatpush1.msra.mxu0 0.0
    %813 = vmatprep.subr.mxu0 0.0
    %814 = vmatpush1.msra.mxu0 0.0
    %815 = vmatprep.subr.mxu0 0.0
    %816 = vmatpush1.msra.mxu0 0.0
    %817 = vmatprep.subr.mxu0 0.0
    %818 = vmatpush1.msra.mxu0 0.0
    %819 = vmatprep.subr.mxu0 0.0
    %820 = vmatpush1.msra.mxu0 0.0
    %821 = vmatprep.subr.mxu0 0.0
    %822 = vmatpush1.msra.mxu0 0.0
    %823 = vmatprep.subr.mxu0 0.0
    %824 = vmatpush1.msra.mxu0 0.0
    %825 = vmatprep.subr.mxu0 0.0
    %826 = vmatpush1.msra.mxu0 0.0
    %827 = vmatprep.subr.mxu0 0.0
    %828 = vmatpush1.msra.mxu0 0.0
    %829 = vmatprep.subr.mxu0 0.0
    %830 = vmatpush1.msra.mxu0 0.0
    %831 = vmatprep.subr.mxu0 0.0
    %832 = vmatpush1.msra.mxu0 0.0
    %833 = vmatprep.subr.mxu0 0.0
    %834 = vmatpush1.msra.mxu0 0.0
    %835 = vmatprep.subr.mxu0 0.0
    %836 = vmatpush1.msra.mxu0 0.0
    %837 = vmatprep.mubr.f32.mxu0 0.0
    %838 = vmatmul.mubr.f32.gmra.mrb[0].mxu0 %v771
    %v839 = vpop.f32.mrb[0].mxu0
    %v840 = vadd.f32 %v768, %v839
    %v841 = vpop.f32.mrb[0].mxu0
    %842 = vdwg.mxu0
    %v843 = vlaneseq
    %v844 = vshrl.u32 %v843, 7
    %vm845 = vcmp.lt.s32.totalorder %v844, 4
    %v846 = vsel %vm845, 1, 0
    %v847 = vcvt.s32.f32 %v846
    %v848 = vmul.f32 %v840, %v847
    %v849 = vsel %vm61, %v848, 0.0
    %v850 = vrot.slane %v849, 4
    %v851 = vadd.f32 %v849, %v850
    %v852 = vrot.slane %v851, 2
    %v853 = vadd.f32 %v851, %v852
    %v854 = vrot.slane %v853, 1
    %v855 = vadd.f32 %v853, %v854
    %v856 = vmul.f32 %v855, 0.25
    %vm857 = vcmask 122880
    %858 = vst.msk [vmem:[#allocation2] sm:$0x1] %vm857, %v856
    %v859 = vsub.f32 %v840, %v856
    %v860 = vmul.f32 %v859, %v859
    %v861 = vsel %vm61, %v860, 0.0
    %862 = vadd.xlane.f32.xlu0 %v861
    %v863 = vpop.xlane.xlu0 %862
    %v864 = vrsqrt.pop %v863
    %v865 = vmul.f32 %v863, %v864
    %vm866 = vcmp.eq.f32.partialorder %v863, inf
    %v867 = vsel %vm866, %v863, %v865
    %vm868 = vcmp.eq.f32.partialorder %v863, 0.0
    %v869 = vand.u32 %v863, 2147483648
    %v870 = vsel %vm868, %v869, %v867
    %v871 = vsub.f32 0.0, %v870
    %v872 = vmul.f32 %v871, 0.6931472
    %v873 = vmul.f32 %v872, 1.442695
    %v874 = vpow.pop %v873
    %vm875 = vcmask 7168
    %876 = vst.msk [vmem:[%s16] sm:$0xff] %vm875, %v874
    // Predicated region
    $region62: #{_forward_impl.1} parent=1 // pred_check
      _
    $region63: #{_forward_impl.1} parent=1 // pred_check_branch
      %878 = sbr.rel (0) target = $region65
    $region64: #{_forward_impl.1} parent=1 // pred_region
      %s880 = ssub.s32 16, 16
      %881 = vsyncadd [#allocation3], %s880
      %s883 = sshll.u32 [#allocation2], 4
      %s884 = int_to_ptr.vmem [resolvable:$true] %s883
      %886 = dma.vmem_to_hbm [thread:$0]  %s884, 16, %s15, [#allocation3]
    $region65: #{_forward_impl.1} parent=1 // pred_fallthru
      _
    // Predicated region
    $region66: #{_forward_impl.1} parent=1 // pred_check
      _
    $region67: #{_forward_impl.1} parent=1 // pred_check_branch
      %888 = sbr.rel (0) target = $region69
    $region68: #{_forward_impl.1} parent=1 // pred_region
      _
    $region69: #{_forward_impl.1} parent=1 // pred_fallthru
      _
    // Predicated region
    $region70: #{_forward_impl.1} parent=1 // pred_check
      _
    $region71: #{_forward_impl.1} parent=1 // pred_check_branch
      %890 = sbr.rel (0) target = $region73
    $region72: #{_forward_impl.1} parent=1 // pred_region
      %891 = dma.done [#allocation3], 16
    $region73: #{_forward_impl.1} parent=1 // pred_fallthru
      _
    // Predicated region
    $region74: #{_forward_impl.1} parent=1 // pred_check
      _
    $region75: #{_forward_impl.1} parent=1 // pred_check_branch
      %893 = sbr.rel (0) target = $region77
    $region76: #{_forward_impl.1} parent=1 // pred_region
      _
    $region77: #{_forward_impl.1} parent=1 // pred_fallthru
      _
    %894 = vsyncpa [#allocation3], 1

</llo_original>
